<compile_context>
chip_gen: v5e
topology: v5e:2x2
jax: 0.10.0
libtpu: 0.0.40
codegen_flags: <defaults>
</compile_context>

<pallas_src>
import math
from functools import partial

import jax
import jax.numpy as jnp
from jax import lax
from jax.experimental import pallas as pl
from jax.experimental.pallas import tpu as pltpu


def _attention_kernel(x_ref, wqkv_ref, wo_ref, bo_ref, o_ref,
                      *, heads: int, dim_head: int, transposed_io: bool,
                      batch_block: int):
    """One grid step == `batch_block` batch elements.

    transposed_io=True  : x_ref is (bb, C, S)  (NCHW path, channels on sublanes)
    transposed_io=False : x_ref is (bb, S, D)  (token-major path)
    wqkv_ref : (D, 3D) bf16  fused [Wq | Wk | Wv], pre-transposed for x @ W
    wo_ref   : (D, D)  bf16  output projection weight, pre-transposed
    bo_ref   : (1, D)  f32   output projection bias
    """
    D = heads * dim_head
    bb = batch_block

    if transposed_io:
        xs = jnp.transpose(x_ref[...], (0, 2, 1))        # (bb, S, C) via XLU
    else:
        xs = x_ref[...]                                  # (bb, S, D)
    S = xs.shape[1]
    x2 = xs.reshape(bb * S, D)                           # fold batch into MXU rows

    # Single fused QKV projection for all bb batch rows (bf16 in, f32 acc).
    qkv = jnp.dot(x2, wqkv_ref[...],
                  preferred_element_type=jnp.float32)    # (bb*S, 3D) f32

    scale = 1.0 / math.sqrt(dim_head)
    q = (qkv[:, 0:D] * scale).astype(jnp.bfloat16).reshape(bb, S, D)  # scale q, not scores
    k = qkv[:, D:2 * D].astype(jnp.bfloat16).reshape(bb, S, D)
    v = qkv[:, 2 * D:3 * D].astype(jnp.bfloat16).reshape(bb, S, D)

    # bb / heads are small static ints -> straight-line code, static slices.
    for b in range(bb):
        qb, kb, vb = q[b], k[b], v[b]                    # (S, D) bf16
        acc = None
        for h in range(heads):
            lo = h * dim_head
            hi = lo + dim_head
            qh = qb[:, lo:hi]                            # (S, dh) bf16
            kh = kb[:, lo:hi]
            vh = vb[:, lo:hi]

            # QK^T without materializing kh.T (contract last dims directly).
            scores = lax.dot_general(
                qh, kh, (((1,), (1,)), ((), ())),
                preferred_element_type=jnp.float32)      # (S, S) f32

            # Numerically-stable softmax, normalization deferred past PV.
            m = jnp.max(scores, axis=-1, keepdims=True)
            e = jnp.exp(scores - m)                      # f32
            l = jnp.sum(e, axis=-1, keepdims=True)       # f32 denom
            oh = jnp.dot(e.astype(jnp.bfloat16), vh,
                         preferred_element_type=jnp.float32)          # (S, dh) f32
            oh = oh * pl.reciprocal(l, approx=True)      # normalize (S, dh), EUP slot

            # Fold output projection into the head loop: slice Wo rows and
            # accumulate -> no concat / relayout of head outputs.
            contrib = jnp.dot(oh.astype(jnp.bfloat16), wo_ref[lo:hi, :],
                              preferred_element_type=jnp.float32)     # (S, D) f32
            acc = contrib if acc is None else acc + contrib

        acc = acc + bo_ref[...]                          # bias added exactly once

        if transposed_io:
            o_ref[b] = acc.T.astype(o_ref.dtype)         # (C, S): lane-dense store
        else:
            o_ref[b] = acc.astype(o_ref.dtype)


def attention_pallas(x, wq, wk, wv, wo, bo, *, heads: int, dim_head: int,
                     batch_block: int = 1):
    """x: (B, S, D) or NCHW (B, C, H, W) with C == heads*dim_head.

    wq/wk/wv/wo are already transposed for `x @ W`; bo is the (D,) out bias.
    batch_block: batch rows fused per grid step (use 1 on v7x with even B to
    keep the 2-TC megacore split; 2-8 on single-TC v5e/v6e to amortize
    per-grid-step overhead).
    """
    D = heads * dim_head
    out_dtype = x.dtype

    # bf16 MXU operands, f32 accumulation (weights cast once in the wrapper).
    wqkv = jnp.concatenate([wq, wk, wv], axis=1).astype(jnp.bfloat16)   # (D, 3D)
    wo_b = wo.astype(jnp.bfloat16)                                      # (D, D)
    bo2 = bo.reshape(1, D).astype(jnp.float32)

    input_ndim = x.ndim
    if input_ndim == 4:
        b_, c, h, w = x.shape
        assert c == D
        S = h * w
        x_in = x.reshape(b_, c, S)                       # free reshape, NO transpose
        transposed_io = True
        B = b_
    else:
        B, S, Dx = x.shape
        assert Dx == D
        x_in = x
        transposed_io = False
        # TODO(synk): (B,S,32) output last dim <128 -> masked stores; a
        # channel-major output layout would make this lane-dense too.

    bb = batch_block if (batch_block >= 1 and B % batch_block == 0) else 1
    x_in = x_in.astype(jnp.bfloat16)

    if transposed_io:
        blk = (bb, D, S)
        out_struct = jax.ShapeDtypeStruct((B, D, S), out_dtype)
    else:
        blk = (bb, S, D)
        out_struct = jax.ShapeDtypeStruct((B, S, D), out_dtype)

    kernel = partial(_attention_kernel, heads=heads, dim_head=dim_head,
                     transposed_io=transposed_io, batch_block=bb)

    out = pl.pallas_call(
        kernel,
        out_shape=out_struct,
        grid_spec=pltpu.PrefetchScalarGridSpec(
            num_scalar_prefetch=0,
            grid=(B // bb,),
            in_specs=[
                pl.BlockSpec(blk, lambda i: (i, 0, 0)),          # x (per-step batch tile)
                pl.BlockSpec((D, 3 * D), lambda i: (0, 0)),      # fused Wqkv (bf16)
                pl.BlockSpec((D, D), lambda i: (0, 0)),          # Wo (bf16)
                pl.BlockSpec((1, D), lambda i: (0, 0)),          # out bias (f32)
            ],
            out_specs=pl.BlockSpec(blk, lambda i: (i, 0, 0)),
        ),
        compiler_params=pltpu.CompilerParams(
            dimension_semantics=("parallel",)),
    )(x_in, wqkv, wo_b, bo2)

    if input_ndim == 4:
        out = out.reshape(b_, c, h, w)                   # free reshape
    return out


def attention_reference(x, wq, wk, wv, wo, bo, *, heads: int, dim_head: int):
    """Plain-JAX f32 reference mirroring the PyTorch module (dropout=0, self-attn)."""
    input_ndim = x.ndim
    if input_ndim == 4:
        b, c, h, w = x.shape
        x = x.reshape(b, c, h * w).transpose(0, 2, 1)
    B, S, D = x.shape
    q = x @ wq
    k = x @ wk
    v = x @ wv
    q = q.reshape(B, S, heads, dim_head).transpose(0, 2, 1, 3)
    k = k.reshape(B, S, heads, dim_head).transpose(0, 2, 1, 3)
    v = v.reshape(B, S, heads, dim_head).transpose(0, 2, 1, 3)
    scale = 1.0 / math.sqrt(dim_head)
    scores = jnp.einsum('bhqd,bhkd->bhqk', q, k) * scale
    p = jax.nn.softmax(scores, axis=-1)
    o = jnp.einsum('bhqk,bhkd->bhqd', p, v)
    o = o.transpose(0, 2, 1, 3).reshape(B, S, D)
    o = o @ wo + bo
    if input_ndim == 4:
        o = o.transpose(0, 2, 1).reshape(b, c, h, w)
    return o


if __name__ == "__main__":
    # Small shapes consistent with the module: heads=2, dim_head=16 -> D=32.
    heads, dim_head = 2, 16
    D = heads * dim_head

    key = jax.random.PRNGKey(0)
    kx, kq, kk, kv, ko, kb, kx3 = jax.random.split(key, 7)

    # nn.Linear(in, out) weights are (out, in); pre-transpose so the kernel
    # computes x @ W directly.  bias=False for q/k/v, out_bias=True.
    std = 1.0 / math.sqrt(D)
    wq = (jax.random.uniform(kq, (D, D), jnp.float32, -std, std)).T
    wk = (jax.random.uniform(kk, (D, D), jnp.float32, -std, std)).T
    wv = (jax.random.uniform(kv, (D, D), jnp.float32, -std, std)).T
    wo = (jax.random.uniform(ko, (D, D), jnp.float32, -std, std)).T
    bo = jax.random.uniform(kb, (D,), jnp.float32, -std, std)

    # Tolerance headroom for bf16 MXU operands + approx (EUP) softmax recip.
    ATOL = RTOL = 6e-2

    # --- Test 1: NCHW input path, batch_block=1 (v7x 2-TC friendly) --------
    B, C, H, W = 2, D, 8, 16                           # seq = H*W = 128
    x4 = jax.random.normal(kx, (B, C, H, W), dtype=jnp.float32)
    out4 = attention_pallas(x4, wq, wk, wv, wo, bo,
                            heads=heads, dim_head=dim_head, batch_block=1)
    out4 = jax.block_until_ready(out4)
    ref4 = attention_reference(x4, wq, wk, wv, wo, bo,
                               heads=heads, dim_head=dim_head)
    assert out4.shape == (B, C, H, W), out4.shape
    assert jnp.allclose(out4, ref4, atol=ATOL, rtol=RTOL), \
        float(jnp.max(jnp.abs(out4 - ref4)))

    # --- Test 2: token-major (B, S, D) path with batch blocking ------------
    B3, S3 = 4, 128
    x3 = jax.random.normal(kx3, (B3, S3, D), dtype=jnp.float32)
    out3 = attention_pallas(x3, wq, wk, wv, wo, bo,
                            heads=heads, dim_head=dim_head, batch_block=2)
    out3 = jax.block_until_ready(out3)
    ref3 = attention_reference(x3, wq, wk, wv, wo, bo,
                               heads=heads, dim_head=dim_head)
    assert out3.shape == (B3, S3, D), out3.shape
    assert jnp.allclose(out3, ref3, atol=ATOL, rtol=RTOL), \
        float(jnp.max(jnp.abs(out3 - ref3)))

    print("KERNEL_OK")
</pallas_src>

<mosaic_0001>
module attributes {stable_mosaic.version = 11 : i64} {
  func.func @_attention_kernel(%arg0: i32, %arg1: memref<1x32x128xbf16, #tpu.memory_space<vmem>>, %arg2: memref<32x96xbf16, #tpu.memory_space<vmem>>, %arg3: memref<32x32xbf16, #tpu.memory_space<vmem>>, %arg4: memref<1x32xf32, #tpu.memory_space<vmem>>, %arg5: memref<1x32x128xf32, #tpu.memory_space<vmem>>) attributes {dimension_semantics = [#tpu.dimension_semantics<parallel>], iteration_bounds = array<i64: 2>, scalar_prefetch = 0 : i64, scratch_operands = 0 : i64, tpu.core_type = #tpu.core_type<tc>, window_params = [{transform_indices = @transform_0, window_bounds = array<i64: 1, 32, 128>}, {pipeline_mode = #tpu.pipeline_mode<synchronous>, transform_indices = @transform_1, window_bounds = array<i64: 32, 96>}, {pipeline_mode = #tpu.pipeline_mode<synchronous>, transform_indices = @transform_2, window_bounds = array<i64: 32, 32>}, {pipeline_mode = #tpu.pipeline_mode<synchronous>, transform_indices = @transform_3, window_bounds = array<i64: 1, 32>}, {transform_indices = @transform_4, window_bounds = array<i64: 1, 32, 128>}]} {
    %c0 = arith.constant 0 : index
    %c0_0 = arith.constant 0 : index
    %c0_1 = arith.constant 0 : index
    %0 = vector.load %arg1[%c0, %c0_0, %c0_1] : memref<1x32x128xbf16, #tpu.memory_space<vmem>>, vector<1x32x128xbf16>
    %1 = tpu.transpose %0, [0, 2, 1] : vector<1x32x128xbf16> -> vector<1x128x32xbf16>
    %2 = vector.shape_cast %1 : vector<1x128x32xbf16> to vector<128x32xbf16>
    %c0_2 = arith.constant 0 : index
    %c0_3 = arith.constant 0 : index
    %3 = vector.load %arg2[%c0_2, %c0_3] : memref<32x96xbf16, #tpu.memory_space<vmem>>, vector<32x96xbf16>
    %cst = arith.constant dense<0.000000e+00> : vector<128x96xf32>
    %4 = tpu.matmul %2, %3, %cst {dimension_numbers = #tpu.dot_dimension_numbers<[1], [0], [0], [1], [0, 0, 1, 1], [], []>} : vector<128x32xbf16>, vector<32x96xbf16>, vector<128x96xf32> -> vector<128x96xf32>
    %5 = vector.extract_strided_slice %4 {offsets = [0, 0], sizes = [128, 32], strides = [1, 1]} : vector<128x96xf32> to vector<128x32xf32>
    %cst_4 = arith.constant 2.500000e-01 : f32
    %6 = vector.broadcast %cst_4 : f32 to vector<128x32xf32>
    %7 = arith.mulf %5, %6 : vector<128x32xf32>
    %8 = arith.truncf %7 : vector<128x32xf32> to vector<128x32xbf16>
    %9 = vector.shape_cast %8 : vector<128x32xbf16> to vector<1x128x32xbf16>
    %10 = vector.extract_strided_slice %4 {offsets = [0, 32], sizes = [128, 32], strides = [1, 1]} : vector<128x96xf32> to vector<128x32xf32>
    %11 = arith.truncf %10 : vector<128x32xf32> to vector<128x32xbf16>
    %12 = vector.shape_cast %11 : vector<128x32xbf16> to vector<1x128x32xbf16>
    %13 = vector.extract_strided_slice %4 {offsets = [0, 64], sizes = [128, 32], strides = [1, 1]} : vector<128x96xf32> to vector<128x32xf32>
    %14 = arith.truncf %13 : vector<128x32xf32> to vector<128x32xbf16>
    %15 = vector.shape_cast %14 : vector<128x32xbf16> to vector<1x128x32xbf16>
    %16 = vector.shape_cast %9 : vector<1x128x32xbf16> to vector<128x32xbf16>
    %17 = vector.shape_cast %12 : vector<1x128x32xbf16> to vector<128x32xbf16>
    %18 = vector.shape_cast %15 : vector<1x128x32xbf16> to vector<128x32xbf16>
    %19 = vector.extract_strided_slice %16 {offsets = [0, 0], sizes = [128, 16], strides = [1, 1]} : vector<128x32xbf16> to vector<128x16xbf16>
    %20 = vector.extract_strided_slice %17 {offsets = [0, 0], sizes = [128, 16], strides = [1, 1]} : vector<128x32xbf16> to vector<128x16xbf16>
    %21 = vector.extract_strided_slice %18 {offsets = [0, 0], sizes = [128, 16], strides = [1, 1]} : vector<128x32xbf16> to vector<128x16xbf16>
    %cst_5 = arith.constant dense<0.000000e+00> : vector<128x128xf32>
    %22 = tpu.matmul %19, %20, %cst_5 {dimension_numbers = #tpu.dot_dimension_numbers<[1], [1], [0], [0], [0, 0, 1, 0], [], []>} : vector<128x16xbf16>, vector<128x16xbf16>, vector<128x128xf32> -> vector<128x128xf32>
    %cst_6 = arith.constant dense<0xFF800000> : vector<128xf32>
    %23 = vector.multi_reduction <maximumf>, %22, %cst_6 [1] : vector<128x128xf32> to vector<128xf32>
    %24 = vector.shape_cast %23 : vector<128xf32> to vector<128x1xf32>
    %25 = vector.broadcast %24 : vector<128x1xf32> to vector<128x128xf32>
    %26 = arith.subf %22, %25 : vector<128x128xf32>
    %27 = math.exp %26 : vector<128x128xf32>
    %cst_7 = arith.constant dense<0.000000e+00> : vector<128xf32>
    %28 = vector.multi_reduction <add>, %27, %cst_7 [1] : vector<128x128xf32> to vector<128xf32>
    %29 = vector.shape_cast %28 : vector<128xf32> to vector<128x1xf32>
    %30 = arith.truncf %27 : vector<128x128xf32> to vector<128x128xbf16>
    %cst_8 = arith.constant dense<0.000000e+00> : vector<128x16xf32>
    %31 = tpu.matmul %30, %21, %cst_8 {dimension_numbers = #tpu.dot_dimension_numbers<[1], [0], [0], [1], [0, 0, 1, 1], [], []>} : vector<128x128xbf16>, vector<128x16xbf16>, vector<128x16xf32> -> vector<128x16xf32>
    %32 = tpu.reciprocal %29 {approx = true} : vector<128x1xf32> -> vector<128x1xf32>
    %33 = vector.broadcast %32 : vector<128x1xf32> to vector<128x16xf32>
    %34 = arith.mulf %31, %33 : vector<128x16xf32>
    %35 = arith.truncf %34 : vector<128x16xf32> to vector<128x16xbf16>
    %c0_9 = arith.constant 0 : index
    %c0_10 = arith.constant 0 : index
    %36 = vector.load %arg3[%c0_9, %c0_10] : memref<32x32xbf16, #tpu.memory_space<vmem>>, vector<16x32xbf16>
    %cst_11 = arith.constant dense<0.000000e+00> : vector<128x32xf32>
    %37 = tpu.matmul %35, %36, %cst_11 {dimension_numbers = #tpu.dot_dimension_numbers<[1], [0], [0], [1], [0, 0, 1, 1], [], []>} : vector<128x16xbf16>, vector<16x32xbf16>, vector<128x32xf32> -> vector<128x32xf32>
    %38 = vector.extract_strided_slice %16 {offsets = [0, 16], sizes = [128, 16], strides = [1, 1]} : vector<128x32xbf16> to vector<128x16xbf16>
    %39 = vector.extract_strided_slice %17 {offsets = [0, 16], sizes = [128, 16], strides = [1, 1]} : vector<128x32xbf16> to vector<128x16xbf16>
    %40 = vector.extract_strided_slice %18 {offsets = [0, 16], sizes = [128, 16], strides = [1, 1]} : vector<128x32xbf16> to vector<128x16xbf16>
    %cst_12 = arith.constant dense<0.000000e+00> : vector<128x128xf32>
    %41 = tpu.matmul %38, %39, %cst_12 {dimension_numbers = #tpu.dot_dimension_numbers<[1], [1], [0], [0], [0, 0, 1, 0], [], []>} : vector<128x16xbf16>, vector<128x16xbf16>, vector<128x128xf32> -> vector<128x128xf32>
    %cst_13 = arith.constant dense<0xFF800000> : vector<128xf32>
    %42 = vector.multi_reduction <maximumf>, %41, %cst_13 [1] : vector<128x128xf32> to vector<128xf32>
    %43 = vector.shape_cast %42 : vector<128xf32> to vector<128x1xf32>
    %44 = vector.broadcast %43 : vector<128x1xf32> to vector<128x128xf32>
    %45 = arith.subf %41, %44 : vector<128x128xf32>
    %46 = math.exp %45 : vector<128x128xf32>
    %cst_14 = arith.constant dense<0.000000e+00> : vector<128xf32>
    %47 = vector.multi_reduction <add>, %46, %cst_14 [1] : vector<128x128xf32> to vector<128xf32>
    %48 = vector.shape_cast %47 : vector<128xf32> to vector<128x1xf32>
    %49 = arith.truncf %46 : vector<128x128xf32> to vector<128x128xbf16>
    %cst_15 = arith.constant dense<0.000000e+00> : vector<128x16xf32>
    %50 = tpu.matmul %49, %40, %cst_15 {dimension_numbers = #tpu.dot_dimension_numbers<[1], [0], [0], [1], [0, 0, 1, 1], [], []>} : vector<128x128xbf16>, vector<128x16xbf16>, vector<128x16xf32> -> vector<128x16xf32>
    %51 = tpu.reciprocal %48 {approx = true} : vector<128x1xf32> -> vector<128x1xf32>
    %52 = vector.broadcast %51 : vector<128x1xf32> to vector<128x16xf32>
    %53 = arith.mulf %50, %52 : vector<128x16xf32>
    %54 = arith.truncf %53 : vector<128x16xf32> to vector<128x16xbf16>
    %c16 = arith.constant 16 : index
    %c0_16 = arith.constant 0 : index
    %55 = vector.load %arg3[%c16, %c0_16] : memref<32x32xbf16, #tpu.memory_space<vmem>>, vector<16x32xbf16>
    %cst_17 = arith.constant dense<0.000000e+00> : vector<128x32xf32>
    %56 = tpu.matmul %54, %55, %cst_17 {dimension_numbers = #tpu.dot_dimension_numbers<[1], [0], [0], [1], [0, 0, 1, 1], [], []>} : vector<128x16xbf16>, vector<16x32xbf16>, vector<128x32xf32> -> vector<128x32xf32>
    %57 = arith.addf %37, %56 : vector<128x32xf32>
    %c0_18 = arith.constant 0 : index
    %c0_19 = arith.constant 0 : index
    %58 = vector.load %arg4[%c0_18, %c0_19] : memref<1x32xf32, #tpu.memory_space<vmem>>, vector<1x32xf32>
    %59 = vector.broadcast %58 : vector<1x32xf32> to vector<128x32xf32>
    %60 = arith.addf %57, %59 : vector<128x32xf32>
    %61 = tpu.transpose %60, [1, 0] : vector<128x32xf32> -> vector<32x128xf32>
    %c0_20 = arith.constant 0 : index
    %c0_21 = arith.constant 0 : index
    %c0_22 = arith.constant 0 : index
    %62 = vector.load %arg5[%c0_20, %c0_21, %c0_22] : memref<1x32x128xf32, #tpu.memory_space<vmem>>, vector<1x32x128xf32>
    %63 = vector.shape_cast %62 : vector<1x32x128xf32> to vector<32x128xf32>
    %64 = vector.shape_cast %61 : vector<32x128xf32> to vector<1x32x128xf32>
    tpu.vector_store %arg5[%c0_20, %c0_21, %c0_22], %64 {strides = array<i32>} : memref<1x32x128xf32, #tpu.memory_space<vmem>>, vector<1x32x128xf32>,
    return
  }
  func.func @transform_0(%arg0: i32) -> (i32, i32, i32) {
    %c0_i32 = arith.constant 0 : i32
    %c0_i32_0 = arith.constant 0 : i32
    %c0_i32_1 = arith.constant 0 : i32
    return %arg0, %c0_i32, %c0_i32_0 : i32, i32, i32
  }
  func.func @transform_1(%arg0: i32) -> (i32, i32) {
    %c0_i32 = arith.constant 0 : i32
    %c0_i32_0 = arith.constant 0 : i32
    %c0_i32_1 = arith.constant 0 : i32
    return %c0_i32, %c0_i32_0 : i32, i32
  }
  func.func @transform_2(%arg0: i32) -> (i32, i32) {
    %c0_i32 = arith.constant 0 : i32
    %c0_i32_0 = arith.constant 0 : i32
    %c0_i32_1 = arith.constant 0 : i32
    return %c0_i32, %c0_i32_0 : i32, i32
  }
  func.func @transform_3(%arg0: i32) -> (i32, i32) {
    %c0_i32 = arith.constant 0 : i32
    %c0_i32_0 = arith.constant 0 : i32
    %c0_i32_1 = arith.constant 0 : i32
    return %c0_i32, %c0_i32_0 : i32, i32
  }
  func.func @transform_4(%arg0: i32) -> (i32, i32, i32) {
    %c0_i32 = arith.constant 0 : i32
    %c0_i32_0 = arith.constant 0 : i32
    %c0_i32_1 = arith.constant 0 : i32
    return %arg0, %c0_i32, %c0_i32_0 : i32, i32, i32
  }
}

</mosaic_0001>

<llo_original>
// kernel: tpu_custom_call.1
$region0: #{tpu_custom_call.1}
  #allocation0 [shape = 'u32[]', space=smem, size = 0x4, offset = 0x4, fixed_abs, tag = 'smem constant byte address 0x4 - core index']
  #allocation1 [shape = 'u32[72,128]{1,0:T(1,128)}', space=vmem, size = 0x9000, scoped, tag = 'internal scratch']
  %s0 = inlined_call_operand.hbm [shape: bf16[2,32,128], index: 0, kind: input, shape index: {}]
  %s1 = inlined_call_operand.hbm [shape: bf16[32,96], index: 1, kind: input, shape index: {}]
  %s2 = inlined_call_operand.hbm [shape: bf16[32,32], index: 2, kind: input, shape index: {}]
  %s3 = inlined_call_operand.vmem [shape: f32[1,32], index: 3, kind: input, shape index: {}]
  %s4 = inlined_call_operand.hbm [shape: f32[2,32,128], index: 4, kind: output, shape index: {}]
  %s5 = sld [smem:[#allocation0]]
  $region61: #{tpu_custom_call.1} parent=0
    _
  %s7 = ssub.s32 1, %s5
  %s8 = scalar_select 0, %s7, %s5
  $region1: #{tpu_custom_call.1} parent=0
    #allocation2 [shape = 'u8[16384]{0}', space=vmem, size = 0x4000, scoped, tag = 'input window, operand 0']
    #allocation3 [shape = 's32[2]{0}', space=sflag, size = 0x8, scoped, tag = 'scoped memory for tpu_custom_call.1']
    #allocation4 [shape = 's32[2]{0}', space=sflag, size = 0x8, scoped, tag = 'scoped memory for tpu_custom_call.1']
    #allocation5 [shape = 'u8[8192]{0}', space=vmem, size = 0x2000, scoped, tag = 'input window, operand 1, single buffered']
    #allocation6 [shape = 's32[1]{0}', space=sflag, size = 0x4, scoped, tag = 'scoped memory for tpu_custom_call.1']
    #allocation7 [shape = 'u8[8192]{0}', space=vmem, size = 0x2000, scoped, tag = 'input window, operand 2, single buffered']
    #allocation8 [shape = 'u8[32768]{0}', space=vmem, size = 0x8000, scoped, tag = 'output window, operand 0']
    %9 = vsyncpa [#allocation3], 0
    %s10 = scalar_lea.sflag [#allocation3], 1
    %11 = vsyncpa %s10, 0
    %12 = vsyncpa [#allocation6], 0
    %13 = vsyncpa [#allocation4], 0
    %s14 = scalar_lea.sflag [#allocation4], 1
    %15 = vsyncpa %s14, 0
    loop: start=0, step=1, limit=4
    $region2: #{tpu_custom_call.1} parent=1 // loop_pre_header
      _
    $region3: #{tpu_custom_call.1} parent=1 // loop_header
      %s17 = sphi 0, %s21
      %p18 = scmp.ge.s32.totalorder %s17, 4
      %s27 = sphi 0, %s29
      %s30 = sphi 0, %s27
      %s31 = sphi 0, %s30
      %s47 = sphi 0, %s31
      %s51 = sphi 0, %s51
      %s53 = sphi 0, %s51
      %s54 = sphi 0, %s53
      %s68 = sphi 0, %s54
      %s72 = sphi 0, %s72
      %s74 = sphi 0, %s72
      %s75 = sphi 0, %s74
      %s89 = sphi 0, %s75
      %s93 = sphi 0, %s93
      %s95 = sphi 0, %s93
      %s96 = sphi 0, %s95
      %s110 = sphi 0, %s96
      %s116 = sphi 0, %s118
      %s119 = sphi 0, %s116
      %s120 = sphi 0, %s119
      %s136 = sphi 0, %s120
    $region4: #{tpu_custom_call.1} parent=1 // loop_header_branch
      %20 = sbr.rel (%p18) target = $region8
    $region5: #{tpu_custom_call.1} parent=1 // loop_body
      %s22 = ssub.s32 %s17, 1
      %s23 = ssub.s32 %s17, 2
      %s24 = sadd.s32 %s17, 1
      %s25 = ssub.s32 %s17, %s24
      %p26 = scmp.eq.s32.totalorder %s25, 0
      %s28 = sadd.s32 %s27, 1
      %s29 = scalar_select %p26, %s27, %s28
      %p32 = pneg %p26
      %p33 = scmp.eq.s32.totalorder %s17, 1
      %p34 = por %p32, %p33
      %p35 = scmp.ne.s32.totalorder %s27, %s30
      %p36 = scmp.eq.s32.totalorder %s17, 0
      %p37 = por %p35, %p36
      %p38 = scmp.ne.s32.totalorder %s27, %s30
      %p39 = scmp.eq.s32.totalorder %s22, 1
      %p40 = por %p38, %p39
      %p41 = scmp.ne.s32.totalorder %s30, %s31
      %p42 = scmp.eq.s32.totalorder %s22, 0
      %p43 = por %p41, %p42
      %p44 = scmp.ne.s32.totalorder %s30, %s31
      %p45 = scmp.eq.s32.totalorder %s23, 1
      %p46 = por %p44, %p45
      %p48 = scmp.ne.s32.totalorder %s31, %s47
      %p49 = scmp.eq.s32.totalorder %s23, 0
      %p50 = por %p48, %p49
      %s52 = sadd.s32 %s51, 1
      %p55 = scmp.eq.s32.totalorder %s17, 1
      %p56 = scmp.ne.s32.totalorder %s51, %s53
      %p57 = scmp.eq.s32.totalorder %s17, 0
      %p58 = por %p56, %p57
      %p59 = scmp.ne.s32.totalorder %s51, %s53
      %p60 = scmp.eq.s32.totalorder %s22, 1
      %p61 = por %p59, %p60
      %p62 = scmp.ne.s32.totalorder %s53, %s54
      %p63 = scmp.eq.s32.totalorder %s22, 0
      %p64 = por %p62, %p63
      %p65 = scmp.ne.s32.totalorder %s53, %s54
      %p66 = scmp.eq.s32.totalorder %s23, 1
      %p67 = por %p65, %p66
      %p69 = scmp.ne.s32.totalorder %s54, %s68
      %p70 = scmp.eq.s32.totalorder %s23, 0
      %p71 = por %p69, %p70
      %s73 = sadd.s32 %s72, 1
      %p76 = scmp.eq.s32.totalorder %s17, 1
      %p77 = scmp.ne.s32.totalorder %s72, %s74
      %p78 = scmp.eq.s32.totalorder %s17, 0
      %p79 = por %p77, %p78
      %p80 = scmp.ne.s32.totalorder %s72, %s74
      %p81 = scmp.eq.s32.totalorder %s22, 1
      %p82 = por %p80, %p81
      %p83 = scmp.ne.s32.totalorder %s74, %s75
      %p84 = scmp.eq.s32.totalorder %s22, 0
      %p85 = por %p83, %p84
      %p86 = scmp.ne.s32.totalorder %s74, %s75
      %p87 = scmp.eq.s32.totalorder %s23, 1
      %p88 = por %p86, %p87
      %p90 = scmp.ne.s32.totalorder %s75, %s89
      %p91 = scmp.eq.s32.totalorder %s23, 0
      %p92 = por %p90, %p91
      %s94 = sadd.s32 %s93, 1
      %p97 = scmp.eq.s32.totalorder %s17, 1
      %p98 = scmp.ne.s32.totalorder %s93, %s95
      %p99 = scmp.eq.s32.totalorder %s17, 0
      %p100 = por %p98, %p99
      %p101 = scmp.ne.s32.totalorder %s93, %s95
      %p102 = scmp.eq.s32.totalorder %s22, 1
      %p103 = por %p101, %p102
      %p104 = scmp.ne.s32.totalorder %s95, %s96
      %p105 = scmp.eq.s32.totalorder %s22, 0
      %p106 = por %p104, %p105
      %p107 = scmp.ne.s32.totalorder %s95, %s96
      %p108 = scmp.eq.s32.totalorder %s23, 1
      %p109 = por %p107, %p108
      %p111 = scmp.ne.s32.totalorder %s96, %s110
      %p112 = scmp.eq.s32.totalorder %s23, 0
      %p113 = por %p111, %p112
      %s114 = ssub.s32 %s17, %s24
      %p115 = scmp.eq.s32.totalorder %s114, 0
      %s117 = sadd.s32 %s116, 1
      %s118 = scalar_select %p115, %s116, %s117
      %p121 = pneg %p115
      %p122 = scmp.eq.s32.totalorder %s17, 1
      %p123 = por %p121, %p122
      %p124 = scmp.ne.s32.totalorder %s116, %s119
      %p125 = scmp.eq.s32.totalorder %s17, 0
      %p126 = por %p124, %p125
      %p127 = scmp.ne.s32.totalorder %s116, %s119
      %p128 = scmp.eq.s32.totalorder %s22, 1
      %p129 = por %p127, %p128
      %p130 = scmp.ne.s32.totalorder %s119, %s120
      %p131 = scmp.eq.s32.totalorder %s22, 0
      %p132 = por %p130, %p131
      %p133 = scmp.ne.s32.totalorder %s119, %s120
      %p134 = scmp.eq.s32.totalorder %s23, 1
      %p135 = por %p133, %p134
      %p137 = scmp.ne.s32.totalorder %s120, %s136
      %p138 = scmp.eq.s32.totalorder %s23, 0
      %p139 = por %p137, %p138
      %p140 = scmp.le.s32.totalorder 1, %s17
      %p141 = scmp.lt.s32.totalorder %s17, 3
      %p142 = pnand %p140, %p141
      %p143 = pneg %p142
      // Predicated region
      $region9: #{tpu_custom_call.1} parent=5 // pred_check
        _
      $region10: #{tpu_custom_call.1} parent=5 // pred_check_branch
        %145 = sbr.rel (%p142) target = $region12
      $region11: #{tpu_custom_call.1} parent=5 // pred_region
        %s146 = ssub.s32 %s17, 1
        // Predicated region
        $region13: #{tpu_custom_call.1} parent=11 // pred_check
          %p147 = pneg %p64
        $region14: #{tpu_custom_call.1} parent=11 // pred_check_branch
          %149 = sbr.rel (%p147) target = $region16
        $region15: #{tpu_custom_call.1} parent=11 // pred_region
          %151 = vsyncadd [#allocation6], 0
          %s152 = sshll.u32 %s1, 4
          %s153 = int_to_ptr.hbm [resolvable:$true] %s152
          %s154 = sshll.u32 [#allocation5], 4
          %s155 = int_to_ptr.vmem [resolvable:$true] %s154
          %160 = dma.hbm_to_vmem [thread:$0]  %s153, 256, %s155, [#allocation6], 64, 64, 4
        $region16: #{tpu_custom_call.1} parent=11 // pred_fallthru
          _
        // Predicated region
        $region17: #{tpu_custom_call.1} parent=11 // pred_check
          %p161 = pneg %p85
        $region18: #{tpu_custom_call.1} parent=11 // pred_check_branch
          %163 = sbr.rel (%p161) target = $region20
        $region19: #{tpu_custom_call.1} parent=11 // pred_region
          %165 = vsyncadd [#allocation6], 0
          %s166 = sshll.u32 %s2, 4
          %s167 = int_to_ptr.hbm [resolvable:$true] %s166
          %s168 = sshll.u32 [#allocation7], 4
          %s169 = int_to_ptr.vmem [resolvable:$true] %s168
          %174 = dma.hbm_to_vmem [thread:$0]  %s167, 256, %s169, [#allocation6], 64, 64, 4
        $region20: #{tpu_custom_call.1} parent=11 // pred_fallthru
          _
        // Predicated region
        $region21: #{tpu_custom_call.1} parent=11 // pred_check
          %p175 = pneg %p106
        $region22: #{tpu_custom_call.1} parent=11 // pred_check_branch
          %177 = sbr.rel (%p175) target = $region24
        $region23: #{tpu_custom_call.1} parent=11 // pred_region
          _
        $region24: #{tpu_custom_call.1} parent=11 // pred_fallthru
          _
      $region12: #{tpu_custom_call.1} parent=5 // pred_fallthru
        _
      %p178 = scmp.lt.s32.totalorder %s17, 2
      // Predicated region
      $region25: #{tpu_custom_call.1} parent=5 // pred_check
        %p179 = pneg %p178
      $region26: #{tpu_custom_call.1} parent=5 // pred_check_branch
        %181 = sbr.rel (%p179) target = $region28
      $region27: #{tpu_custom_call.1} parent=5 // pred_region
        // Predicated region
        $region29: #{tpu_custom_call.1} parent=27 // pred_check
          %p182 = pneg %p37
        $region30: #{tpu_custom_call.1} parent=27 // pred_check_branch
          %184 = sbr.rel (%p182) target = $region32
        $region31: #{tpu_custom_call.1} parent=27 // pred_region
          %s185 = sand.u32 %s27, 1
          %s186 = scalar_lea.sflag [#allocation3], %s185
          %s187 = sand.u32 %s27, 1
          %s188 = smul.addr %s187, 16
          %s189 = scalar_lea.vmem [#allocation2], %s188
          %191 = vsyncadd %s186, 0
          %s192 = smul.addr %s17, 4
          %s193 = smul.addr %s192, 4
          %s194 = scalar_lea.hbm %s0, %s193
          %s195 = sshll.u32 %s194, 4
          %s196 = int_to_ptr.hbm [resolvable:$true] %s195
          %s197 = sshll.u32 %s189, 4
          %s198 = int_to_ptr.vmem [resolvable:$true] %s197
          %203 = dma.hbm_to_vmem [thread:$0]  %s196, 256, %s198, %s186, 64, 64, 4
        $region32: #{tpu_custom_call.1} parent=27 // pred_fallthru
          _
      $region28: #{tpu_custom_call.1} parent=5 // pred_fallthru
        _
      %p204 = scmp.le.s32.totalorder 1, %s17
      %p205 = scmp.lt.s32.totalorder %s17, 3
      %p206 = pnand %p204, %p205
      %p207 = pneg %p206
      // Predicated region
      $region33: #{tpu_custom_call.1} parent=5 // pred_check
        _
      $region34: #{tpu_custom_call.1} parent=5 // pred_check_branch
        %209 = sbr.rel (%p206) target = $region36
      $region35: #{tpu_custom_call.1} parent=5 // pred_region
        %s210 = ssub.s32 %s17, 1
        %s211 = sand.u32 %s30, 1
        %s212 = scalar_lea.sflag [#allocation3], %s211
        %s213 = sand.u32 %s30, 1
        %s214 = smul.addr %s213, 16
        %s215 = scalar_lea.vmem [#allocation2], %s214
        // Predicated region
        $region37: #{tpu_custom_call.1} parent=35 // pred_check
          %p216 = pneg %p43
        $region38: #{tpu_custom_call.1} parent=35 // pred_check_branch
          %218 = sbr.rel (%p216) target = $region40
        $region39: #{tpu_custom_call.1} parent=35 // pred_region
          %220 = dma.done %s212, 256
        $region40: #{tpu_custom_call.1} parent=35 // pred_fallthru
          _
        // Predicated region
        $region41: #{tpu_custom_call.1} parent=35 // pred_check
          %p221 = pneg %p64
        $region42: #{tpu_custom_call.1} parent=35 // pred_check_branch
          %223 = sbr.rel (%p221) target = $region44
        $region43: #{tpu_custom_call.1} parent=35 // pred_region
          %225 = dma.done [#allocation6], 256
        $region44: #{tpu_custom_call.1} parent=35 // pred_fallthru
          _
        // Predicated region
        $region45: #{tpu_custom_call.1} parent=35 // pred_check
          %p226 = pneg %p85
        $region46: #{tpu_custom_call.1} parent=35 // pred_check_branch
          %228 = sbr.rel (%p226) target = $region48
        $region47: #{tpu_custom_call.1} parent=35 // pred_region
          %230 = dma.done [#allocation6], 256
        $region48: #{tpu_custom_call.1} parent=35 // pred_fallthru
          _
        %s231 = sand.u32 %s30, 1
        %s232 = scalar_lea.sflag [#allocation3], %s231
        %s233 = sand.u32 %s30, 1
        %s234 = smul.addr %s233, 16
        %s235 = scalar_lea.vmem [#allocation2], %s234
        %p236 = pneg %p43
        %p237 = pneg %p40
        %p238 = pneg %p64
        %p239 = pneg %p61
        %p240 = pneg %p85
        %p241 = pneg %p82
        %p242 = pneg %p106
        %p243 = pneg %p103
        %p244 = pneg %p132
        %p245 = pneg %p129
        %s246 = sand.u32 %s119, 1
        %s247 = scalar_lea.sflag [#allocation4], %s246
        %s248 = sand.u32 %s119, 1
        %s249 = smul.addr %s248, 32
        %s250 = scalar_lea.vmem [#allocation8], %s249
        %v252 = vld [vmem:[%s215] sm:$0xf]
        %v253 = vld [vmem:[%s215 + $0x4] sm:$0xf]
        %v254 = vld [vmem:[%s215 + $0x8] sm:$0xf]
        %v255 = vld [vmem:[%s215 + $0xc] sm:$0xf]
        %v260 = vunpack.c.l.b16 %v252
        %v261 = vunpack.c.l.b16 %v253
        %v262 = vunpack.c.l.b16 %v254
        %v263 = vunpack.c.l.b16 %v255
        %v264 = vpack.c.b16 %v261, %v260
        %v265 = vpack.c.b16 %v263, %v262
        %268 = vxpose.xlu0.c.b16.start [1/8] %v264, 128
        %269 = vxpose.xlu0.c.b16.cont [2/8] %v265, 128
        %270 = vxpose.xlu0.c.b16.cont [3/8] 0, 128
        %271 = vxpose.xlu0.c.b16.cont [4/8] 0, 128
        %272 = vxpose.xlu0.c.b16.cont [5/8] 0, 128
        %273 = vxpose.xlu0.c.b16.cont [6/8] 0, 128
        %274 = vxpose.xlu0.c.b16.cont [7/8] 0, 128
        %275 = vxpose.xlu0.c.b16.end [8/8] 0, 128
        %v276 = vpop.trf.xlu0
        %v277 = vpop.trf.xlu0
        %v278 = vpop.trf.xlu0
        %v279 = vpop.trf.xlu0
        %v280 = vpop.trf.xlu0
        %v281 = vpop.trf.xlu0
        %v282 = vpop.trf.xlu0
        %v283 = vpop.trf.xlu0
        %v284 = vld [vmem:[#allocation5] sm:$0xf]
        %v285 = vld [vmem:[#allocation5 + $0x4] sm:$0xf]
        %v286 = vld [vmem:[#allocation5 + $0x8] sm:$0xf]
        %v287 = vld [vmem:[#allocation5 + $0xc] sm:$0xf]
        %v292 = vunpack.c.l.b16 %v284
        %v293 = vunpack.c.l.b16 %v285
        %v294 = vunpack.c.l.b16 %v286
        %v295 = vunpack.c.l.b16 %v287
        %v296 = vpack.c.b16 %v293, %v292
        %v297 = vpack.c.b16 %v295, %v294
        %vm300 = vcmask 261120
        %v302 = vsel %vm300, %v276, 0
        %v305 = vsel %vm300, %v277, 0
        %v308 = vsel %vm300, %v278, 0
        %v311 = vsel %vm300, %v279, 0
        %v314 = vsel %vm300, %v280, 0
        %v317 = vsel %vm300, %v281, 0
        %v320 = vsel %vm300, %v282, 0
        %v323 = vsel %vm300, %v283, 0
        %325 = vmatpush.bf16.msra.mxu0 0
        %326 = vmatpush.bf16.msra.mxu0 0
        %327 = vmatpush.bf16.msra.mxu0 0
        %328 = vmatpush.bf16.msra.mxu0 0
        %329 = vmatpush.bf16.msra.mxu0 0
        %330 = vmatpush.bf16.msra.mxu0 0
        %331 = vmatpush.bf16.msra.mxu0 %v297
        %332 = vmatpush.bf16.msra.mxu0 %v296
        %333 = vmatmul.bf16.gmra.mxu0 %v302
        %v334 = vpop.f32.mrf.mxu0
        %v335 = vadd.f32 0.0, %v334
        %v336 = vpop.f32.mrf.mxu0
        %v337 = vadd.f32 0.0, %v336
        %338 = vmatmul.bf16.gmra.mxu0 %v305
        %v339 = vpop.f32.mrf.mxu0
        %v340 = vadd.f32 0.0, %v339
        %v341 = vpop.f32.mrf.mxu0
        %v342 = vadd.f32 0.0, %v341
        %343 = vmatmul.bf16.gmra.mxu0 %v308
        %v344 = vpop.f32.mrf.mxu0
        %v345 = vadd.f32 0.0, %v344
        %v346 = vpop.f32.mrf.mxu0
        %v347 = vadd.f32 0.0, %v346
        %348 = vmatmul.bf16.gmra.mxu0 %v311
        %v349 = vpop.f32.mrf.mxu0
        %v350 = vadd.f32 0.0, %v349
        %v351 = vpop.f32.mrf.mxu0
        %v352 = vadd.f32 0.0, %v351
        %353 = vmatmul.bf16.gmra.mxu0 %v314
        %v354 = vpop.f32.mrf.mxu0
        %v355 = vadd.f32 0.0, %v354
        %v356 = vpop.f32.mrf.mxu0
        %v357 = vadd.f32 0.0, %v356
        %358 = vmatmul.bf16.gmra.mxu0 %v317
        %v359 = vpop.f32.mrf.mxu0
        %v360 = vadd.f32 0.0, %v359
        %v361 = vpop.f32.mrf.mxu0
        %v362 = vadd.f32 0.0, %v361
        %363 = vmatmul.bf16.gmra.mxu0 %v320
        %v364 = vpop.f32.mrf.mxu0
        %v365 = vadd.f32 0.0, %v364
        %v366 = vpop.f32.mrf.mxu0
        %v367 = vadd.f32 0.0, %v366
        %368 = vmatmul.bf16.gmra.mxu0 %v323
        %v369 = vpop.f32.mrf.mxu0
        %v370 = vadd.f32 0.0, %v369
        %v371 = vpop.f32.mrf.mxu0
        %v372 = vadd.f32 0.0, %v371
        %373 = vdwg.mxu0
        %v374 = vmul.f32 %v335, 0.25
        %v375 = vmul.f32 %v337, 0.25
        %v376 = vmul.f32 %v340, 0.25
        %v377 = vmul.f32 %v342, 0.25
        %v378 = vmul.f32 %v345, 0.25
        %v379 = vmul.f32 %v347, 0.25
        %v380 = vmul.f32 %v350, 0.25
        %v381 = vmul.f32 %v352, 0.25
        %v382 = vmul.f32 %v355, 0.25
        %v383 = vmul.f32 %v357, 0.25
        %v384 = vmul.f32 %v360, 0.25
        %v385 = vmul.f32 %v362, 0.25
        %v386 = vmul.f32 %v365, 0.25
        %v387 = vmul.f32 %v367, 0.25
        %v388 = vmul.f32 %v370, 0.25
        %v389 = vmul.f32 %v372, 0.25
        %v390 = vpack.c.bf16 %v374, %v374
        %v391 = vpack.c.bf16 %v375, %v375
        %v392 = vpack.c.bf16 %v376, %v376
        %v393 = vpack.c.bf16 %v377, %v377
        %v394 = vpack.c.bf16 %v378, %v378
        %v395 = vpack.c.bf16 %v379, %v379
        %v396 = vpack.c.bf16 %v380, %v380
        %v397 = vpack.c.bf16 %v381, %v381
        %v398 = vpack.c.bf16 %v382, %v382
        %v399 = vpack.c.bf16 %v383, %v383
        %v400 = vpack.c.bf16 %v384, %v384
        %v401 = vpack.c.bf16 %v385, %v385
        %v402 = vpack.c.bf16 %v386, %v386
        %v403 = vpack.c.bf16 %v387, %v387
        %v404 = vpack.c.bf16 %v388, %v388
        %v405 = vpack.c.bf16 %v389, %v389
        %v406 = vpack.c.bf16 %v335, %v335
        %v407 = vpack.c.bf16 %v337, %v337
        %v408 = vpack.c.bf16 %v340, %v340
        %v409 = vpack.c.bf16 %v342, %v342
        %v410 = vpack.c.bf16 %v345, %v345
        %v411 = vpack.c.bf16 %v347, %v347
        %v412 = vpack.c.bf16 %v350, %v350
        %v413 = vpack.c.bf16 %v352, %v352
        %v414 = vpack.c.bf16 %v355, %v355
        %v415 = vpack.c.bf16 %v357, %v357
        %v416 = vpack.c.bf16 %v360, %v360
        %v417 = vpack.c.bf16 %v362, %v362
        %v418 = vpack.c.bf16 %v365, %v365
        %v419 = vpack.c.bf16 %v367, %v367
        %v420 = vpack.c.bf16 %v370, %v370
        %v421 = vpack.c.bf16 %v372, %v372
        %v438 = vunpack.c.l.b16 %v390
        %v439 = vunpack.c.l.b16 %v391
        %v440 = vunpack.c.l.b16 %v392
        %v441 = vunpack.c.l.b16 %v393
        %v442 = vunpack.c.l.b16 %v394
        %v443 = vunpack.c.l.b16 %v395
        %v444 = vunpack.c.l.b16 %v396
        %v445 = vunpack.c.l.b16 %v397
        %v446 = vunpack.c.l.b16 %v398
        %v447 = vunpack.c.l.b16 %v399
        %v448 = vunpack.c.l.b16 %v400
        %v449 = vunpack.c.l.b16 %v401
        %v450 = vunpack.c.l.b16 %v402
        %v451 = vunpack.c.l.b16 %v403
        %v452 = vunpack.c.l.b16 %v404
        %v453 = vunpack.c.l.b16 %v405
        %v454 = vpack.c.b16 %v439, %v438
        %v455 = vpack.c.b16 %v441, %v440
        %v456 = vpack.c.b16 %v443, %v442
        %v457 = vpack.c.b16 %v445, %v444
        %v458 = vpack.c.b16 %v447, %v446
        %v459 = vpack.c.b16 %v449, %v448
        %v460 = vpack.c.b16 %v451, %v450
        %v461 = vpack.c.b16 %v453, %v452
        %v478 = vunpack.c.l.b16 %v406
        %v479 = vunpack.c.l.b16 %v407
        %v480 = vunpack.c.l.b16 %v408
        %v481 = vunpack.c.l.b16 %v409
        %v482 = vunpack.c.l.b16 %v410
        %v483 = vunpack.c.l.b16 %v411
        %v484 = vunpack.c.l.b16 %v412
        %v485 = vunpack.c.l.b16 %v413
        %v486 = vunpack.c.l.b16 %v414
        %v487 = vunpack.c.l.b16 %v415
        %v488 = vunpack.c.l.b16 %v416
        %v489 = vunpack.c.l.b16 %v417
        %v490 = vunpack.c.l.b16 %v418
        %v491 = vunpack.c.l.b16 %v419
        %v492 = vunpack.c.l.b16 %v420
        %v493 = vunpack.c.l.b16 %v421
        %v494 = vpack.c.b16 %v479, %v478
        %v495 = vpack.c.b16 %v481, %v480
        %v496 = vpack.c.b16 %v483, %v482
        %v497 = vpack.c.b16 %v485, %v484
        %v498 = vpack.c.b16 %v487, %v486
        %v499 = vpack.c.b16 %v489, %v488
        %v500 = vpack.c.b16 %v491, %v490
        %v501 = vpack.c.b16 %v493, %v492
        %502 = vrot.lane.b32.xlu0 %v494, 96
        %v503 = vpop.permute.xlu0 %502
        %504 = vrot.lane.b32.xlu0 %v495, 96
        %v505 = vpop.permute.xlu0 %504
        %506 = vrot.lane.b32.xlu0 %v496, 96
        %v507 = vpop.permute.xlu0 %506
        %508 = vrot.lane.b32.xlu0 %v497, 96
        %v509 = vpop.permute.xlu0 %508
        %510 = vrot.lane.b32.xlu0 %v498, 96
        %v511 = vpop.permute.xlu0 %510
        %512 = vrot.lane.b32.xlu0 %v499, 96
        %v513 = vpop.permute.xlu0 %512
        %514 = vrot.lane.b32.xlu0 %v500, 96
        %v515 = vpop.permute.xlu0 %514
        %516 = vrot.lane.b32.xlu0 %v501, 96
        %v517 = vpop.permute.xlu0 %516
        %vm518 = vcmask 130048
        %v520 = vsel %vm518, %v454, 0
        %v523 = vsel %vm518, %v455, 0
        %v526 = vsel %vm518, %v456, 0
        %v529 = vsel %vm518, %v457, 0
        %v532 = vsel %vm518, %v458, 0
        %v535 = vsel %vm518, %v459, 0
        %v538 = vsel %vm518, %v460, 0
        %v541 = vsel %vm518, %v461, 0
        %v544 = vsel %vm518, %v503, 0
        %v547 = vsel %vm518, %v505, 0
        %v550 = vsel %vm518, %v507, 0
        %v553 = vsel %vm518, %v509, 0
        %v556 = vsel %vm518, %v511, 0
        %v559 = vsel %vm518, %v513, 0
        %v562 = vsel %vm518, %v515, 0
        %v565 = vsel %vm518, %v517, 0
        %567 = vmatpush.bf16.xpose.msra.mxu0 %v565
        %568 = vmatpush.bf16.xpose.msra.mxu0 %v562
        %569 = vmatpush.bf16.xpose.msra.mxu0 %v559
        %570 = vmatpush.bf16.xpose.msra.mxu0 %v556
        %571 = vmatpush.bf16.xpose.msra.mxu0 %v553
        %572 = vmatpush.bf16.xpose.msra.mxu0 %v550
        %573 = vmatpush.bf16.xpose.msra.mxu0 %v547
        %574 = vmatpush.bf16.xpose.msra.mxu0 %v544
        %575 = vmatmul.bf16.gmra.mxu0 %v520
        %v576 = vpop.f32.mrf.mxu0
        %v577 = vadd.f32 0.0, %v576
        %v578 = vpop.f32.mrf.mxu0
        %v579 = vadd.f32 0.0, %v578
        %580 = vmatmul.bf16.gmra.mxu0 %v523
        %v581 = vpop.f32.mrf.mxu0
        %v582 = vadd.f32 0.0, %v581
        %v583 = vpop.f32.mrf.mxu0
        %v584 = vadd.f32 0.0, %v583
        %585 = vmatmul.bf16.gmra.mxu0 %v526
        %v586 = vpop.f32.mrf.mxu0
        %v587 = vadd.f32 0.0, %v586
        %v588 = vpop.f32.mrf.mxu0
        %v589 = vadd.f32 0.0, %v588
        %590 = vmatmul.bf16.gmra.mxu0 %v529
        %v591 = vpop.f32.mrf.mxu0
        %v592 = vadd.f32 0.0, %v591
        %v593 = vpop.f32.mrf.mxu0
        %v594 = vadd.f32 0.0, %v593
        %595 = vmatmul.bf16.gmra.mxu0 %v532
        %v596 = vpop.f32.mrf.mxu0
        %v597 = vadd.f32 0.0, %v596
        %v598 = vpop.f32.mrf.mxu0
        %v599 = vadd.f32 0.0, %v598
        %600 = vmatmul.bf16.gmra.mxu0 %v535
        %v601 = vpop.f32.mrf.mxu0
        %v602 = vadd.f32 0.0, %v601
        %v603 = vpop.f32.mrf.mxu0
        %v604 = vadd.f32 0.0, %v603
        %605 = vmatmul.bf16.gmra.mxu0 %v538
        %v606 = vpop.f32.mrf.mxu0
        %v607 = vadd.f32 0.0, %v606
        %v608 = vpop.f32.mrf.mxu0
        %v609 = vadd.f32 0.0, %v608
        %610 = vmatmul.bf16.gmra.mxu0 %v541
        %v611 = vpop.f32.mrf.mxu0
        %v612 = vadd.f32 0.0, %v611
        %v613 = vpop.f32.mrf.mxu0
        %v614 = vadd.f32 0.0, %v613
        %615 = vdwg.mxu0
        %616 = vmax.xlane.f32.xlu0 %v577
        %v617 = vpop.xlane.xlu0 %616
        %618 = vmax.xlane.f32.xlu0 %v579
        %v619 = vpop.xlane.xlu0 %618
        %620 = vmax.xlane.f32.xlu0 %v582
        %v621 = vpop.xlane.xlu0 %620
        %622 = vmax.xlane.f32.xlu0 %v584
        %v623 = vpop.xlane.xlu0 %622
        %624 = vmax.xlane.f32.xlu0 %v587
        %v625 = vpop.xlane.xlu0 %624
        %626 = vmax.xlane.f32.xlu0 %v589
        %v627 = vpop.xlane.xlu0 %626
        %628 = vmax.xlane.f32.xlu0 %v592
        %v629 = vpop.xlane.xlu0 %628
        %630 = vmax.xlane.f32.xlu0 %v594
        %v631 = vpop.xlane.xlu0 %630
        %632 = vmax.xlane.f32.xlu0 %v597
        %v633 = vpop.xlane.xlu0 %632
        %634 = vmax.xlane.f32.xlu0 %v599
        %v635 = vpop.xlane.xlu0 %634
        %636 = vmax.xlane.f32.xlu0 %v602
        %v637 = vpop.xlane.xlu0 %636
        %638 = vmax.xlane.f32.xlu0 %v604
        %v639 = vpop.xlane.xlu0 %638
        %640 = vmax.xlane.f32.xlu0 %v607
        %v641 = vpop.xlane.xlu0 %640
        %642 = vmax.xlane.f32.xlu0 %v609
        %v643 = vpop.xlane.xlu0 %642
        %644 = vmax.xlane.f32.xlu0 %v612
        %v645 = vpop.xlane.xlu0 %644
        %646 = vmax.xlane.f32.xlu0 %v614
        %v647 = vpop.xlane.xlu0 %646
        %v648 = vsub.f32 %v577, %v617
        %v649 = vsub.f32 %v579, %v619
        %v650 = vsub.f32 %v582, %v621
        %v651 = vsub.f32 %v584, %v623
        %v652 = vsub.f32 %v587, %v625
        %v653 = vsub.f32 %v589, %v627
        %v654 = vsub.f32 %v592, %v629
        %v655 = vsub.f32 %v594, %v631
        %v656 = vsub.f32 %v597, %v633
        %v657 = vsub.f32 %v599, %v635
        %v658 = vsub.f32 %v602, %v637
        %v659 = vsub.f32 %v604, %v639
        %v660 = vsub.f32 %v607, %v641
        %v661 = vsub.f32 %v609, %v643
        %v662 = vsub.f32 %v612, %v645
        %v663 = vsub.f32 %v614, %v647
        %v664 = vmul.f32 %v648, 1.442695
        %v665 = vpow.pop %v664
        %v666 = vmul.f32 %v649, 1.442695
        %v667 = vpow.pop %v666
        %v668 = vmul.f32 %v650, 1.442695
        %v669 = vpow.pop %v668
        %v670 = vmul.f32 %v651, 1.442695
        %v671 = vpow.pop %v670
        %v672 = vmul.f32 %v652, 1.442695
        %v673 = vpow.pop %v672
        %v674 = vmul.f32 %v653, 1.442695
        %v675 = vpow.pop %v674
        %v676 = vmul.f32 %v654, 1.442695
        %v677 = vpow.pop %v676
        %v678 = vmul.f32 %v655, 1.442695
        %v679 = vpow.pop %v678
        %v680 = vmul.f32 %v656, 1.442695
        %v681 = vpow.pop %v680
        %v682 = vmul.f32 %v657, 1.442695
        %v683 = vpow.pop %v682
        %v684 = vmul.f32 %v658, 1.442695
        %v685 = vpow.pop %v684
        %v686 = vmul.f32 %v659, 1.442695
        %v687 = vpow.pop %v686
        %v688 = vmul.f32 %v660, 1.442695
        %v689 = vpow.pop %v688
        %v690 = vmul.f32 %v661, 1.442695
        %v691 = vpow.pop %v690
        %v692 = vmul.f32 %v662, 1.442695
        %v693 = vpow.pop %v692
        %v694 = vmul.f32 %v663, 1.442695
        %v695 = vpow.pop %v694
        %696 = vadd.xlane.f32.xlu0 %v665
        %v697 = vpop.xlane.xlu0 %696
        %698 = vadd.xlane.f32.xlu0 %v667
        %v699 = vpop.xlane.xlu0 %698
        %700 = vadd.xlane.f32.xlu0 %v669
        %v701 = vpop.xlane.xlu0 %700
        %702 = vadd.xlane.f32.xlu0 %v671
        %v703 = vpop.xlane.xlu0 %702
        %704 = vadd.xlane.f32.xlu0 %v673
        %v705 = vpop.xlane.xlu0 %704
        %706 = vadd.xlane.f32.xlu0 %v675
        %v707 = vpop.xlane.xlu0 %706
        %708 = vadd.xlane.f32.xlu0 %v677
        %v709 = vpop.xlane.xlu0 %708
        %710 = vadd.xlane.f32.xlu0 %v679
        %v711 = vpop.xlane.xlu0 %710
        %712 = vadd.xlane.f32.xlu0 %v681
        %v713 = vpop.xlane.xlu0 %712
        %714 = vadd.xlane.f32.xlu0 %v683
        %v715 = vpop.xlane.xlu0 %714
        %716 = vadd.xlane.f32.xlu0 %v685
        %v717 = vpop.xlane.xlu0 %716
        %718 = vadd.xlane.f32.xlu0 %v687
        %v719 = vpop.xlane.xlu0 %718
        %720 = vadd.xlane.f32.xlu0 %v689
        %v721 = vpop.xlane.xlu0 %720
        %722 = vadd.xlane.f32.xlu0 %v691
        %v723 = vpop.xlane.xlu0 %722
        %724 = vadd.xlane.f32.xlu0 %v693
        %v725 = vpop.xlane.xlu0 %724
        %726 = vadd.xlane.f32.xlu0 %v695
        %v727 = vpop.xlane.xlu0 %726
        %v728 = vpack.c.bf16 %v667, %v665
        %v729 = vpack.c.bf16 %v671, %v669
        %v730 = vpack.c.bf16 %v675, %v673
        %v731 = vpack.c.bf16 %v679, %v677
        %v732 = vpack.c.bf16 %v683, %v681
        %v733 = vpack.c.bf16 %v687, %v685
        %v734 = vpack.c.bf16 %v691, %v689
        %v735 = vpack.c.bf16 %v695, %v693
        %736 = vrot.lane.b32.xlu0 %v494, 64
        %v737 = vpop.permute.xlu0 %736
        %738 = vrot.lane.b32.xlu0 %v495, 64
        %v739 = vpop.permute.xlu0 %738
        %740 = vrot.lane.b32.xlu0 %v496, 64
        %v741 = vpop.permute.xlu0 %740
        %742 = vrot.lane.b32.xlu0 %v497, 64
        %v743 = vpop.permute.xlu0 %742
        %744 = vrot.lane.b32.xlu0 %v498, 64
        %v745 = vpop.permute.xlu0 %744
        %746 = vrot.lane.b32.xlu0 %v499, 64
        %v747 = vpop.permute.xlu0 %746
        %748 = vrot.lane.b32.xlu0 %v500, 64
        %v749 = vpop.permute.xlu0 %748
        %750 = vrot.lane.b32.xlu0 %v501, 64
        %v751 = vpop.permute.xlu0 %750
        %760 = vmatpush.bf16.msra.mxu0 %v751
        %761 = vmatpush.bf16.msra.mxu0 %v749
        %762 = vmatpush.bf16.msra.mxu0 %v747
        %763 = vmatpush.bf16.msra.mxu0 %v745
        %764 = vmatpush.bf16.msra.mxu0 %v743
        %765 = vmatpush.bf16.msra.mxu0 %v741
        %766 = vmatpush.bf16.msra.mxu0 %v739
        %767 = vmatpush.bf16.msra.mxu0 %v737
        %768 = vmatmul.bf16.gmra.mxu0 %v728
        %v769 = vpop.f32.mrf.mxu0
        %v770 = vadd.f32 0.0, %v769
        %v771 = vpop.f32.mrf.mxu0
        %v772 = vadd.f32 0.0, %v771
        %773 = vmatmul.bf16.gmra.mxu0 %v729
        %v774 = vpop.f32.mrf.mxu0
        %v775 = vadd.f32 0.0, %v774
        %v776 = vpop.f32.mrf.mxu0
        %v777 = vadd.f32 0.0, %v776
        %778 = vmatmul.bf16.gmra.mxu0 %v730
        %v779 = vpop.f32.mrf.mxu0
        %v780 = vadd.f32 0.0, %v779
        %v781 = vpop.f32.mrf.mxu0
        %v782 = vadd.f32 0.0, %v781
        %783 = vmatmul.bf16.gmra.mxu0 %v731
        %v784 = vpop.f32.mrf.mxu0
        %v785 = vadd.f32 0.0, %v784
        %v786 = vpop.f32.mrf.mxu0
        %v787 = vadd.f32 0.0, %v786
        %788 = vmatmul.bf16.gmra.mxu0 %v732
        %v789 = vpop.f32.mrf.mxu0
        %v790 = vadd.f32 0.0, %v789
        %v791 = vpop.f32.mrf.mxu0
        %v792 = vadd.f32 0.0, %v791
        %793 = vmatmul.bf16.gmra.mxu0 %v733
        %v794 = vpop.f32.mrf.mxu0
        %v795 = vadd.f32 0.0, %v794
        %v796 = vpop.f32.mrf.mxu0
        %v797 = vadd.f32 0.0, %v796
        %798 = vmatmul.bf16.gmra.mxu0 %v734
        %v799 = vpop.f32.mrf.mxu0
        %v800 = vadd.f32 0.0, %v799
        %v801 = vpop.f32.mrf.mxu0
        %v802 = vadd.f32 0.0, %v801
        %803 = vmatmul.bf16.gmra.mxu0 %v735
        %v804 = vpop.f32.mrf.mxu0
        %v805 = vadd.f32 0.0, %v804
        %v806 = vpop.f32.mrf.mxu0
        %v807 = vadd.f32 0.0, %v806
        %808 = vdwg.mxu0
        %v809 = vrcp.pop %v697
        %v810 = vrcp.pop %v699
        %v811 = vrcp.pop %v701
        %v812 = vrcp.pop %v703
        %v813 = vrcp.pop %v705
        %v814 = vrcp.pop %v707
        %v815 = vrcp.pop %v709
        %v816 = vrcp.pop %v711
        %v817 = vrcp.pop %v713
        %v818 = vrcp.pop %v715
        %v819 = vrcp.pop %v717
        %v820 = vrcp.pop %v719
        %v821 = vrcp.pop %v721
        %v822 = vrcp.pop %v723
        %v823 = vrcp.pop %v725
        %v824 = vrcp.pop %v727
        %v825 = vmul.f32 %v770, %v809
        %v826 = vmul.f32 %v772, %v810
        %v827 = vmul.f32 %v775, %v811
        %v828 = vmul.f32 %v777, %v812
        %v829 = vmul.f32 %v780, %v813
        %v830 = vmul.f32 %v782, %v814
        %v831 = vmul.f32 %v785, %v815
        %v832 = vmul.f32 %v787, %v816
        %v833 = vmul.f32 %v790, %v817
        %v834 = vmul.f32 %v792, %v818
        %v835 = vmul.f32 %v795, %v819
        %v836 = vmul.f32 %v797, %v820
        %v837 = vmul.f32 %v800, %v821
        %v838 = vmul.f32 %v802, %v822
        %v839 = vmul.f32 %v805, %v823
        %v840 = vmul.f32 %v807, %v824
        %v841 = vpack.c.bf16 %v826, %v825
        %v842 = vpack.c.bf16 %v828, %v827
        %v843 = vpack.c.bf16 %v830, %v829
        %v844 = vpack.c.bf16 %v832, %v831
        %v845 = vpack.c.bf16 %v834, %v833
        %v846 = vpack.c.bf16 %v836, %v835
        %v847 = vpack.c.bf16 %v838, %v837
        %v848 = vpack.c.bf16 %v840, %v839
        %v849 = vld [vmem:[#allocation7] sm:$0xf]
        %v850 = vld [vmem:[#allocation7 + $0x4] sm:$0xf]
        %851 = vrot.lane.b32.xlu0 %v454, 112
        %v852 = vpop.permute.xlu0 %851
        %853 = vrot.lane.b32.xlu0 %v455, 112
        %v854 = vpop.permute.xlu0 %853
        %855 = vrot.lane.b32.xlu0 %v456, 112
        %v856 = vpop.permute.xlu0 %855
        %857 = vrot.lane.b32.xlu0 %v457, 112
        %v858 = vpop.permute.xlu0 %857
        %859 = vrot.lane.b32.xlu0 %v458, 112
        %v860 = vpop.permute.xlu0 %859
        %861 = vrot.lane.b32.xlu0 %v459, 112
        %v862 = vpop.permute.xlu0 %861
        %863 = vrot.lane.b32.xlu0 %v460, 112
        %v864 = vpop.permute.xlu0 %863
        %865 = vrot.lane.b32.xlu0 %v461, 112
        %v866 = vpop.permute.xlu0 %865
        %867 = vrot.lane.b32.xlu0 %v494, 80
        %v868 = vpop.permute.xlu0 %867
        %869 = vrot.lane.b32.xlu0 %v495, 80
        %v870 = vpop.permute.xlu0 %869
        %871 = vrot.lane.b32.xlu0 %v496, 80
        %v872 = vpop.permute.xlu0 %871
        %873 = vrot.lane.b32.xlu0 %v497, 80
        %v874 = vpop.permute.xlu0 %873
        %875 = vrot.lane.b32.xlu0 %v498, 80
        %v876 = vpop.permute.xlu0 %875
        %877 = vrot.lane.b32.xlu0 %v499, 80
        %v878 = vpop.permute.xlu0 %877
        %879 = vrot.lane.b32.xlu0 %v500, 80
        %v880 = vpop.permute.xlu0 %879
        %881 = vrot.lane.b32.xlu0 %v501, 80
        %v882 = vpop.permute.xlu0 %881
        %v884 = vsel %vm518, %v852, 0
        %v887 = vsel %vm518, %v854, 0
        %v890 = vsel %vm518, %v856, 0
        %v893 = vsel %vm518, %v858, 0
        %v896 = vsel %vm518, %v860, 0
        %v899 = vsel %vm518, %v862, 0
        %v902 = vsel %vm518, %v864, 0
        %v905 = vsel %vm518, %v866, 0
        %v908 = vsel %vm518, %v868, 0
        %v911 = vsel %vm518, %v870, 0
        %v914 = vsel %vm518, %v872, 0
        %v917 = vsel %vm518, %v874, 0
        %v920 = vsel %vm518, %v876, 0
        %v923 = vsel %vm518, %v878, 0
        %v926 = vsel %vm518, %v880, 0
        %v929 = vsel %vm518, %v882, 0
        %931 = vmatpush.bf16.xpose.msra.mxu0 %v929
        %932 = vmatpush.bf16.xpose.msra.mxu0 %v926
        %933 = vmatpush.bf16.xpose.msra.mxu0 %v923
        %934 = vmatpush.bf16.xpose.msra.mxu0 %v920
        %935 = vmatpush.bf16.xpose.msra.mxu0 %v917
        %936 = vmatpush.bf16.xpose.msra.mxu0 %v914
        %937 = vmatpush.bf16.xpose.msra.mxu0 %v911
        %938 = vmatpush.bf16.xpose.msra.mxu0 %v908
        %939 = vmatmul.bf16.gmra.mxu0 %v884
        %v940 = vpop.f32.mrf.mxu0
        %v941 = vadd.f32 0.0, %v940
        %v942 = vpop.f32.mrf.mxu0
        %v943 = vadd.f32 0.0, %v942
        %944 = vmatmul.bf16.gmra.mxu0 %v887
        %v945 = vpop.f32.mrf.mxu0
        %v946 = vadd.f32 0.0, %v945
        %v947 = vpop.f32.mrf.mxu0
        %v948 = vadd.f32 0.0, %v947
        %949 = vmatmul.bf16.gmra.mxu0 %v890
        %v950 = vpop.f32.mrf.mxu0
        %v951 = vadd.f32 0.0, %v950
        %v952 = vpop.f32.mrf.mxu0
        %v953 = vadd.f32 0.0, %v952
        %954 = vmatmul.bf16.gmra.mxu0 %v893
        %v955 = vpop.f32.mrf.mxu0
        %v956 = vadd.f32 0.0, %v955
        %v957 = vpop.f32.mrf.mxu0
        %v958 = vadd.f32 0.0, %v957
        %959 = vmatmul.bf16.gmra.mxu0 %v896
        %v960 = vpop.f32.mrf.mxu0
        %v961 = vadd.f32 0.0, %v960
        %v962 = vpop.f32.mrf.mxu0
        %v963 = vadd.f32 0.0, %v962
        %964 = vmatmul.bf16.gmra.mxu0 %v899
        %v965 = vpop.f32.mrf.mxu0
        %v966 = vadd.f32 0.0, %v965
        %v967 = vpop.f32.mrf.mxu0
        %v968 = vadd.f32 0.0, %v967
        %969 = vmatmul.bf16.gmra.mxu0 %v902
        %v970 = vpop.f32.mrf.mxu0
        %v971 = vadd.f32 0.0, %v970
        %v972 = vpop.f32.mrf.mxu0
        %v973 = vadd.f32 0.0, %v972
        %974 = vmatmul.bf16.gmra.mxu0 %v905
        %v975 = vpop.f32.mrf.mxu0
        %v976 = vadd.f32 0.0, %v975
        %v977 = vpop.f32.mrf.mxu0
        %v978 = vadd.f32 0.0, %v977
        %979 = vdwg.mxu0
        %980 = vmax.xlane.f32.xlu0 %v941
        %v981 = vpop.xlane.xlu0 %980
        %982 = vmax.xlane.f32.xlu0 %v943
        %v983 = vpop.xlane.xlu0 %982
        %984 = vmax.xlane.f32.xlu0 %v946
        %v985 = vpop.xlane.xlu0 %984
        %986 = vmax.xlane.f32.xlu0 %v948
        %v987 = vpop.xlane.xlu0 %986
        %988 = vmax.xlane.f32.xlu0 %v951
        %v989 = vpop.xlane.xlu0 %988
        %990 = vmax.xlane.f32.xlu0 %v953
        %v991 = vpop.xlane.xlu0 %990
        %992 = vmax.xlane.f32.xlu0 %v956
        %v993 = vpop.xlane.xlu0 %992
        %994 = vmax.xlane.f32.xlu0 %v958
        %v995 = vpop.xlane.xlu0 %994
        %996 = vmax.xlane.f32.xlu0 %v961
        %v997 = vpop.xlane.xlu0 %996
        %998 = vmax.xlane.f32.xlu0 %v963
        %v999 = vpop.xlane.xlu0 %998
        %1000 = vmax.xlane.f32.xlu0 %v966
        %v1001 = vpop.xlane.xlu0 %1000
        %1002 = vmax.xlane.f32.xlu0 %v968
        %v1003 = vpop.xlane.xlu0 %1002
        %1004 = vmax.xlane.f32.xlu0 %v971
        %v1005 = vpop.xlane.xlu0 %1004
        %1006 = vmax.xlane.f32.xlu0 %v973
        %v1007 = vpop.xlane.xlu0 %1006
        %1008 = vmax.xlane.f32.xlu0 %v976
        %v1009 = vpop.xlane.xlu0 %1008
        %1010 = vmax.xlane.f32.xlu0 %v978
        %v1011 = vpop.xlane.xlu0 %1010
        %v1012 = vsub.f32 %v941, %v981
        %v1013 = vsub.f32 %v943, %v983
        %v1014 = vsub.f32 %v946, %v985
        %v1015 = vsub.f32 %v948, %v987
        %v1016 = vsub.f32 %v951, %v989
        %v1017 = vsub.f32 %v953, %v991
        %v1018 = vsub.f32 %v956, %v993
        %v1019 = vsub.f32 %v958, %v995
        %v1020 = vsub.f32 %v961, %v997
        %v1021 = vsub.f32 %v963, %v999
        %v1022 = vsub.f32 %v966, %v1001
        %v1023 = vsub.f32 %v968, %v1003
        %v1024 = vsub.f32 %v971, %v1005
        %v1025 = vsub.f32 %v973, %v1007
        %v1026 = vsub.f32 %v976, %v1009
        %v1027 = vsub.f32 %v978, %v1011
        %v1028 = vmul.f32 %v1012, 1.442695
        %v1029 = vpow.pop %v1028
        %v1030 = vmul.f32 %v1013, 1.442695
        %v1031 = vpow.pop %v1030
        %v1032 = vmul.f32 %v1014, 1.442695
        %v1033 = vpow.pop %v1032
        %v1034 = vmul.f32 %v1015, 1.442695
        %v1035 = vpow.pop %v1034
        %v1036 = vmul.f32 %v1016, 1.442695
        %v1037 = vpow.pop %v1036
        %v1038 = vmul.f32 %v1017, 1.442695
        %v1039 = vpow.pop %v1038
        %v1040 = vmul.f32 %v1018, 1.442695
        %v1041 = vpow.pop %v1040
        %v1042 = vmul.f32 %v1019, 1.442695
        %v1043 = vpow.pop %v1042
        %v1044 = vmul.f32 %v1020, 1.442695
        %v1045 = vpow.pop %v1044
        %v1046 = vmul.f32 %v1021, 1.442695
        %v1047 = vpow.pop %v1046
        %v1048 = vmul.f32 %v1022, 1.442695
        %v1049 = vpow.pop %v1048
        %v1050 = vmul.f32 %v1023, 1.442695
        %v1051 = vpow.pop %v1050
        %v1052 = vmul.f32 %v1024, 1.442695
        %v1053 = vpow.pop %v1052
        %v1054 = vmul.f32 %v1025, 1.442695
        %v1055 = vpow.pop %v1054
        %v1056 = vmul.f32 %v1026, 1.442695
        %v1057 = vpow.pop %v1056
        %v1058 = vmul.f32 %v1027, 1.442695
        %v1059 = vpow.pop %v1058
        %1060 = vadd.xlane.f32.xlu0 %v1029
        %v1061 = vpop.xlane.xlu0 %1060
        %1062 = vadd.xlane.f32.xlu0 %v1031
        %v1063 = vpop.xlane.xlu0 %1062
        %1064 = vadd.xlane.f32.xlu0 %v1033
        %v1065 = vpop.xlane.xlu0 %1064
        %1066 = vadd.xlane.f32.xlu0 %v1035
        %v1067 = vpop.xlane.xlu0 %1066
        %1068 = vadd.xlane.f32.xlu0 %v1037
        %v1069 = vpop.xlane.xlu0 %1068
        %1070 = vadd.xlane.f32.xlu0 %v1039
        %v1071 = vpop.xlane.xlu0 %1070
        %1072 = vadd.xlane.f32.xlu0 %v1041
        %v1073 = vpop.xlane.xlu0 %1072
        %1074 = vadd.xlane.f32.xlu0 %v1043
        %v1075 = vpop.xlane.xlu0 %1074
        %1076 = vadd.xlane.f32.xlu0 %v1045
        %v1077 = vpop.xlane.xlu0 %1076
        %1078 = vadd.xlane.f32.xlu0 %v1047
        %v1079 = vpop.xlane.xlu0 %1078
        %1080 = vadd.xlane.f32.xlu0 %v1049
        %v1081 = vpop.xlane.xlu0 %1080
        %1082 = vadd.xlane.f32.xlu0 %v1051
        %v1083 = vpop.xlane.xlu0 %1082
        %1084 = vadd.xlane.f32.xlu0 %v1053
        %v1085 = vpop.xlane.xlu0 %1084
        %1086 = vadd.xlane.f32.xlu0 %v1055
        %v1087 = vpop.xlane.xlu0 %1086
        %1088 = vadd.xlane.f32.xlu0 %v1057
        %v1089 = vpop.xlane.xlu0 %1088
        %1090 = vadd.xlane.f32.xlu0 %v1059
        %v1091 = vpop.xlane.xlu0 %1090
        %v1092 = vpack.c.bf16 %v1031, %v1029
        %v1093 = vpack.c.bf16 %v1035, %v1033
        %v1094 = vpack.c.bf16 %v1039, %v1037
        %v1095 = vpack.c.bf16 %v1043, %v1041
        %v1096 = vpack.c.bf16 %v1047, %v1045
        %v1097 = vpack.c.bf16 %v1051, %v1049
        %v1098 = vpack.c.bf16 %v1055, %v1053
        %v1099 = vpack.c.bf16 %v1059, %v1057
        %1100 = vrot.lane.b32.xlu0 %v494, 48
        %v1101 = vpop.permute.xlu0 %1100
        %1102 = vrot.lane.b32.xlu0 %v495, 48
        %v1103 = vpop.permute.xlu0 %1102
        %1104 = vrot.lane.b32.xlu0 %v496, 48
        %v1105 = vpop.permute.xlu0 %1104
        %1106 = vrot.lane.b32.xlu0 %v497, 48
        %v1107 = vpop.permute.xlu0 %1106
        %1108 = vrot.lane.b32.xlu0 %v498, 48
        %v1109 = vpop.permute.xlu0 %1108
        %1110 = vrot.lane.b32.xlu0 %v499, 48
        %v1111 = vpop.permute.xlu0 %1110
        %1112 = vrot.lane.b32.xlu0 %v500, 48
        %v1113 = vpop.permute.xlu0 %1112
        %1114 = vrot.lane.b32.xlu0 %v501, 48
        %v1115 = vpop.permute.xlu0 %1114
        %1124 = vmatpush.bf16.msra.mxu0 %v1115
        %1125 = vmatpush.bf16.msra.mxu0 %v1113
        %1126 = vmatpush.bf16.msra.mxu0 %v1111
        %1127 = vmatpush.bf16.msra.mxu0 %v1109
        %1128 = vmatpush.bf16.msra.mxu0 %v1107
        %1129 = vmatpush.bf16.msra.mxu0 %v1105
        %1130 = vmatpush.bf16.msra.mxu0 %v1103
        %1131 = vmatpush.bf16.msra.mxu0 %v1101
        %1132 = vmatmul.bf16.gmra.mxu0 %v1092
        %v1133 = vpop.f32.mrf.mxu0
        %v1134 = vadd.f32 0.0, %v1133
        %v1135 = vpop.f32.mrf.mxu0
        %v1136 = vadd.f32 0.0, %v1135
        %1137 = vmatmul.bf16.gmra.mxu0 %v1093
        %v1138 = vpop.f32.mrf.mxu0
        %v1139 = vadd.f32 0.0, %v1138
        %v1140 = vpop.f32.mrf.mxu0
        %v1141 = vadd.f32 0.0, %v1140
        %1142 = vmatmul.bf16.gmra.mxu0 %v1094
        %v1143 = vpop.f32.mrf.mxu0
        %v1144 = vadd.f32 0.0, %v1143
        %v1145 = vpop.f32.mrf.mxu0
        %v1146 = vadd.f32 0.0, %v1145
        %1147 = vmatmul.bf16.gmra.mxu0 %v1095
        %v1148 = vpop.f32.mrf.mxu0
        %v1149 = vadd.f32 0.0, %v1148
        %v1150 = vpop.f32.mrf.mxu0
        %v1151 = vadd.f32 0.0, %v1150
        %1152 = vmatmul.bf16.gmra.mxu0 %v1096
        %v1153 = vpop.f32.mrf.mxu0
        %v1154 = vadd.f32 0.0, %v1153
        %v1155 = vpop.f32.mrf.mxu0
        %v1156 = vadd.f32 0.0, %v1155
        %1157 = vmatmul.bf16.gmra.mxu0 %v1097
        %v1158 = vpop.f32.mrf.mxu0
        %v1159 = vadd.f32 0.0, %v1158
        %v1160 = vpop.f32.mrf.mxu0
        %v1161 = vadd.f32 0.0, %v1160
        %1162 = vmatmul.bf16.gmra.mxu0 %v1098
        %v1163 = vpop.f32.mrf.mxu0
        %v1164 = vadd.f32 0.0, %v1163
        %v1165 = vpop.f32.mrf.mxu0
        %v1166 = vadd.f32 0.0, %v1165
        %1167 = vmatmul.bf16.gmra.mxu0 %v1099
        %v1168 = vpop.f32.mrf.mxu0
        %v1169 = vadd.f32 0.0, %v1168
        %v1170 = vpop.f32.mrf.mxu0
        %v1171 = vadd.f32 0.0, %v1170
        %1172 = vdwg.mxu0
        %v1173 = vrcp.pop %v1061
        %v1174 = vrcp.pop %v1063
        %v1175 = vrcp.pop %v1065
        %v1176 = vrcp.pop %v1067
        %v1177 = vrcp.pop %v1069
        %v1178 = vrcp.pop %v1071
        %v1179 = vrcp.pop %v1073
        %v1180 = vrcp.pop %v1075
        %v1181 = vrcp.pop %v1077
        %v1182 = vrcp.pop %v1079
        %v1183 = vrcp.pop %v1081
        %v1184 = vrcp.pop %v1083
        %v1185 = vrcp.pop %v1085
        %v1186 = vrcp.pop %v1087
        %v1187 = vrcp.pop %v1089
        %v1188 = vrcp.pop %v1091
        %v1189 = vmul.f32 %v1134, %v1173
        %v1190 = vmul.f32 %v1136, %v1174
        %v1191 = vmul.f32 %v1139, %v1175
        %v1192 = vmul.f32 %v1141, %v1176
        %v1193 = vmul.f32 %v1144, %v1177
        %v1194 = vmul.f32 %v1146, %v1178
        %v1195 = vmul.f32 %v1149, %v1179
        %v1196 = vmul.f32 %v1151, %v1180
        %v1197 = vmul.f32 %v1154, %v1181
        %v1198 = vmul.f32 %v1156, %v1182
        %v1199 = vmul.f32 %v1159, %v1183
        %v1200 = vmul.f32 %v1161, %v1184
        %v1201 = vmul.f32 %v1164, %v1185
        %v1202 = vmul.f32 %v1166, %v1186
        %v1203 = vmul.f32 %v1169, %v1187
        %v1204 = vmul.f32 %v1171, %v1188
        %v1205 = vpack.c.bf16 %v1190, %v1189
        %v1206 = vpack.c.bf16 %v1192, %v1191
        %v1207 = vpack.c.bf16 %v1194, %v1193
        %v1208 = vpack.c.bf16 %v1196, %v1195
        %v1209 = vpack.c.bf16 %v1198, %v1197
        %v1210 = vpack.c.bf16 %v1200, %v1199
        %v1211 = vpack.c.bf16 %v1202, %v1201
        %v1212 = vpack.c.bf16 %v1204, %v1203
        %v1213 = vld [vmem:[#allocation7 + $0x8] sm:$0xf]
        %v1214 = vld [vmem:[#allocation7 + $0xc] sm:$0xf]
        %v1217 = vunpack.c.l.b16 %v1213
        %v1218 = vunpack.c.l.b16 %v1214
        %v1219 = vpack.c.b16 %v1218, %v1217
        %v1222 = vsel %vm518, %v1205, 0
        %v1225 = vsel %vm518, %v1206, 0
        %v1228 = vsel %vm518, %v1207, 0
        %v1231 = vsel %vm518, %v1208, 0
        %v1234 = vsel %vm518, %v1209, 0
        %v1237 = vsel %vm518, %v1210, 0
        %v1240 = vsel %vm518, %v1211, 0
        %v1243 = vsel %vm518, %v1212, 0
        %1245 = vmatpush.bf16.msra.mxu0 0
        %1246 = vmatpush.bf16.msra.mxu0 0
        %1247 = vmatpush.bf16.msra.mxu0 0
        %1248 = vmatpush.bf16.msra.mxu0 0
        %1249 = vmatpush.bf16.msra.mxu0 0
        %1250 = vmatpush.bf16.msra.mxu0 0
        %1251 = vmatpush.bf16.msra.mxu0 0
        %1252 = vmatpush.bf16.msra.mxu0 %v1219
        %1253 = vmatmul.bf16.gmra.mxu0 %v1222
        %v1254 = vpop.f32.mrf.mxu0
        %v1255 = vadd.f32 0.0, %v1254
        %v1256 = vpop.f32.mrf.mxu0
        %v1257 = vadd.f32 0.0, %v1256
        %1258 = vmatmul.bf16.gmra.mxu0 %v1225
        %v1259 = vpop.f32.mrf.mxu0
        %v1260 = vadd.f32 0.0, %v1259
        %v1261 = vpop.f32.mrf.mxu0
        %v1262 = vadd.f32 0.0, %v1261
        %1263 = vmatmul.bf16.gmra.mxu0 %v1228
        %v1264 = vpop.f32.mrf.mxu0
        %v1265 = vadd.f32 0.0, %v1264
        %v1266 = vpop.f32.mrf.mxu0
        %v1267 = vadd.f32 0.0, %v1266
        %1268 = vmatmul.bf16.gmra.mxu0 %v1231
        %v1269 = vpop.f32.mrf.mxu0
        %v1270 = vadd.f32 0.0, %v1269
        %v1271 = vpop.f32.mrf.mxu0
        %v1272 = vadd.f32 0.0, %v1271
        %1273 = vmatmul.bf16.gmra.mxu0 %v1234
        %v1274 = vpop.f32.mrf.mxu0
        %v1275 = vadd.f32 0.0, %v1274
        %v1276 = vpop.f32.mrf.mxu0
        %v1277 = vadd.f32 0.0, %v1276
        %1278 = vmatmul.bf16.gmra.mxu0 %v1237
        %v1279 = vpop.f32.mrf.mxu0
        %v1280 = vadd.f32 0.0, %v1279
        %v1281 = vpop.f32.mrf.mxu0
        %v1282 = vadd.f32 0.0, %v1281
        %1283 = vmatmul.bf16.gmra.mxu0 %v1240
        %v1284 = vpop.f32.mrf.mxu0
        %v1285 = vadd.f32 0.0, %v1284
        %v1286 = vpop.f32.mrf.mxu0
        %v1287 = vadd.f32 0.0, %v1286
        %1288 = vmatmul.bf16.gmra.mxu0 %v1243
        %v1289 = vpop.f32.mrf.mxu0
        %v1290 = vadd.f32 0.0, %v1289
        %v1291 = vpop.f32.mrf.mxu0
        %v1292 = vadd.f32 0.0, %v1291
        %1293 = vdwg.mxu0
        %v1296 = vunpack.c.l.b16 %v849
        %v1297 = vunpack.c.l.b16 %v850
        %v1298 = vpack.c.b16 %v1297, %v1296
        %v1301 = vsel %vm518, %v841, 0
        %v1304 = vsel %vm518, %v842, 0
        %v1307 = vsel %vm518, %v843, 0
        %v1310 = vsel %vm518, %v844, 0
        %v1313 = vsel %vm518, %v845, 0
        %v1316 = vsel %vm518, %v846, 0
        %v1319 = vsel %vm518, %v847, 0
        %v1322 = vsel %vm518, %v848, 0
        %1324 = vmatpush.bf16.msra.mxu0 0
        %1325 = vmatpush.bf16.msra.mxu0 0
        %1326 = vmatpush.bf16.msra.mxu0 0
        %1327 = vmatpush.bf16.msra.mxu0 0
        %1328 = vmatpush.bf16.msra.mxu0 0
        %1329 = vmatpush.bf16.msra.mxu0 0
        %1330 = vmatpush.bf16.msra.mxu0 0
        %1331 = vmatpush.bf16.msra.mxu0 %v1298
        %1332 = vmatmul.bf16.gmra.mxu0 %v1301
        %v1333 = vpop.f32.mrf.mxu0
        %v1334 = vadd.f32 %v1255, %v1333
        %v1335 = vpop.f32.mrf.mxu0
        %v1336 = vadd.f32 %v1257, %v1335
        %1337 = vmatmul.bf16.gmra.mxu0 %v1304
        %v1338 = vpop.f32.mrf.mxu0
        %v1339 = vadd.f32 %v1260, %v1338
        %v1340 = vpop.f32.mrf.mxu0
        %v1341 = vadd.f32 %v1262, %v1340
        %1342 = vmatmul.bf16.gmra.mxu0 %v1307
        %v1343 = vpop.f32.mrf.mxu0
        %v1344 = vadd.f32 %v1265, %v1343
        %v1345 = vpop.f32.mrf.mxu0
        %v1346 = vadd.f32 %v1267, %v1345
        %1347 = vmatmul.bf16.gmra.mxu0 %v1310
        %v1348 = vpop.f32.mrf.mxu0
        %v1349 = vadd.f32 %v1270, %v1348
        %v1350 = vpop.f32.mrf.mxu0
        %v1351 = vadd.f32 %v1272, %v1350
        %1352 = vmatmul.bf16.gmra.mxu0 %v1313
        %v1353 = vpop.f32.mrf.mxu0
        %v1354 = vadd.f32 %v1275, %v1353
        %v1355 = vpop.f32.mrf.mxu0
        %v1356 = vadd.f32 %v1277, %v1355
        %1357 = vmatmul.bf16.gmra.mxu0 %v1316
        %v1358 = vpop.f32.mrf.mxu0
        %v1359 = vadd.f32 %v1280, %v1358
        %v1360 = vpop.f32.mrf.mxu0
        %v1361 = vadd.f32 %v1282, %v1360
        %1362 = vmatmul.bf16.gmra.mxu0 %v1319
        %v1363 = vpop.f32.mrf.mxu0
        %v1364 = vadd.f32 %v1285, %v1363
        %v1365 = vpop.f32.mrf.mxu0
        %v1366 = vadd.f32 %v1287, %v1365
        %1367 = vmatmul.bf16.gmra.mxu0 %v1322
        %v1368 = vpop.f32.mrf.mxu0
        %v1369 = vadd.f32 %v1290, %v1368
        %v1370 = vpop.f32.mrf.mxu0
        %v1371 = vadd.f32 %v1292, %v1370
        %1372 = vdwg.mxu0
        %v1373 = vld [vmem:[%s3] sm:$0x1]
        %v1375 = vperm.slane %v1373, 0
        %v1377 = vadd.f32 %v1334, %v1375
        %v1378 = vadd.f32 %v1336, %v1375
        %v1379 = vadd.f32 %v1339, %v1375
        %v1380 = vadd.f32 %v1341, %v1375
        %v1381 = vadd.f32 %v1344, %v1375
        %v1382 = vadd.f32 %v1346, %v1375
        %v1383 = vadd.f32 %v1349, %v1375
        %v1384 = vadd.f32 %v1351, %v1375
        %v1385 = vadd.f32 %v1354, %v1375
        %v1386 = vadd.f32 %v1356, %v1375
        %v1387 = vadd.f32 %v1359, %v1375
        %v1388 = vadd.f32 %v1361, %v1375
        %v1389 = vadd.f32 %v1364, %v1375
        %v1390 = vadd.f32 %v1366, %v1375
        %v1391 = vadd.f32 %v1369, %v1375
        %v1392 = vadd.f32 %v1371, %v1375
        %1393 = vxpose.xlu0.b32.start [1/16] %v1377, 128
        %1394 = vxpose.xlu0.b32.cont [2/16] %v1378, 128
        %1395 = vxpose.xlu0.b32.cont [3/16] %v1379, 128
        %1396 = vxpose.xlu0.b32.cont [4/16] %v1380, 128
        %1397 = vxpose.xlu0.b32.cont [5/16] %v1381, 128
        %1398 = vxpose.xlu0.b32.cont [6/16] %v1382, 128
        %1399 = vxpose.xlu0.b32.cont [7/16] %v1383, 128
        %1400 = vxpose.xlu0.b32.cont [8/16] %v1384, 128
        %1401 = vxpose.xlu0.b32.cont [9/16] %v1385, 128
        %1402 = vxpose.xlu0.b32.cont [10/16] %v1386, 128
        %1403 = vxpose.xlu0.b32.cont [11/16] %v1387, 128
        %1404 = vxpose.xlu0.b32.cont [12/16] %v1388, 128
        %1405 = vxpose.xlu0.b32.cont [13/16] %v1389, 128
        %1406 = vxpose.xlu0.b32.cont [14/16] %v1390, 128
        %1407 = vxpose.xlu0.b32.cont [15/16] %v1391, 128
        %1408 = vxpose.xlu0.b32.end [16/16] %v1392, 128
        %v1409 = vpop.trf.xlu0
        %v1410 = vpop.trf.xlu0
        %v1411 = vpop.trf.xlu0
        %v1412 = vpop.trf.xlu0
        %v1413 = vpop.trf.xlu0
        %v1414 = vpop.trf.xlu0
        %v1415 = vpop.trf.xlu0
        %v1416 = vpop.trf.xlu0
        %v1417 = vpop.trf.xlu0
        %v1418 = vpop.trf.xlu0
        %v1419 = vpop.trf.xlu0
        %v1420 = vpop.trf.xlu0
        %v1421 = vpop.trf.xlu0
        %v1422 = vpop.trf.xlu0
        %v1423 = vpop.trf.xlu0
        %v1424 = vpop.trf.xlu0
        %1425 = vst [vmem:[%s250] sm:$0xff] %v1409
        %1426 = vst [vmem:[%s250 + $0x8] sm:$0xff] %v1410
        %1427 = vst [vmem:[%s250 + $0x10] sm:$0xff] %v1411
        %1428 = vst [vmem:[%s250 + $0x18] sm:$0xff] %v1412
        %s1429 = sand.u32 %s119, 1
        %s1430 = scalar_lea.sflag [#allocation4], %s1429
        %s1431 = sand.u32 %s119, 1
        %s1432 = smul.addr %s1431, 32
        %s1433 = scalar_lea.vmem [#allocation8], %s1432
        // Predicated region
        $region49: #{tpu_custom_call.1} parent=35 // pred_check
          %p1434 = pneg %p129
        $region50: #{tpu_custom_call.1} parent=35 // pred_check_branch
          %1436 = sbr.rel (%p1434) target = $region52
        $region51: #{tpu_custom_call.1} parent=35 // pred_region
          %1438 = vsyncadd %s1430, 0
          %s1439 = smul.addr %s22, 4
          %s1440 = smul.addr %s1439, 8
          %s1441 = scalar_lea.hbm %s4, %s1440
          %s1442 = sshll.u32 %s1433, 4
          %s1443 = int_to_ptr.vmem [resolvable:$true] %s1442
          %s1444 = sshll.u32 %s1441, 4
          %s1445 = int_to_ptr.hbm [resolvable:$true] %s1444
          %1450 = dma.vmem_to_hbm [thread:$0]  %s1443, 512, %s1445, %s1430, 128, 128, 8
        $region52: #{tpu_custom_call.1} parent=35 // pred_fallthru
          _
      $region36: #{tpu_custom_call.1} parent=5 // pred_fallthru
        _
      %p1451 = scmp.le.s32.totalorder 2, %s17
      // Predicated region
      $region53: #{tpu_custom_call.1} parent=5 // pred_check
        %p1452 = pneg %p1451
      $region54: #{tpu_custom_call.1} parent=5 // pred_check_branch
        %1454 = sbr.rel (%p1452) target = $region56
      $region55: #{tpu_custom_call.1} parent=5 // pred_region
        %s1455 = ssub.s32 %s17, 2
        // Predicated region
        $region57: #{tpu_custom_call.1} parent=55 // pred_check
          %p1456 = pneg %p135
        $region58: #{tpu_custom_call.1} parent=55 // pred_check_branch
          %1458 = sbr.rel (%p1456) target = $region60
        $region59: #{tpu_custom_call.1} parent=55 // pred_region
          %s1459 = sand.u32 %s120, 1
          %s1460 = scalar_lea.sflag [#allocation4], %s1459
          %s1461 = sand.u32 %s120, 1
          %s1462 = smul.addr %s1461, 32
          %s1463 = scalar_lea.vmem [#allocation8], %s1462
          %1465 = dma.done %s1460, 512
        $region60: #{tpu_custom_call.1} parent=55 // pred_fallthru
          _
      $region56: #{tpu_custom_call.1} parent=5 // pred_fallthru
        _
    $region6: #{tpu_custom_call.1} parent=1 // loop_footer
      %s21 = sadd.s32 1, %s17
    $region7: #{tpu_custom_call.1} parent=1 // loop_footer_branch
      %16 = sbr.rel target = $region3
    $region8: #{tpu_custom_call.1} parent=1 // loop_exit
      _
    %1466 = vsyncpa [#allocation3], 1
    %s1467 = scalar_lea.sflag [#allocation3], 1
    %1468 = vsyncpa %s1467, 1
    %1469 = vsyncpa [#allocation6], 1
    %1470 = vsyncpa [#allocation4], 1
    %s1471 = scalar_lea.sflag [#allocation4], 1
    %1472 = vsyncpa %s1471, 1

</llo_original>
